<compile_context>
chip_gen: v6e
topology: v6e:2x2x1
jax: 0.10.0
libtpu: 0.0.40
codegen_flags: <defaults>
</compile_context>

<pallas_src>
import jax
import jax.numpy as jnp
from jax.experimental import pallas as pl
from jax.experimental.pallas import tpu as pltpu


# ---------------------------------------------------------------------------
# Fused single-pass kernel: block = (Nb, C, HW) per grid step.
# ---------------------------------------------------------------------------
def _se_fused_kernel(x_ref, w1_ref, b1_ref, w2_ref, b2_ref, o_ref):
    nb = x_ref.shape[0]
    inv_hw = 1.0 / x_ref.shape[2]

    def body(i, carry):
        # Global average pool over the spatial (lane) axis, accumulate in f32.
        pooled = jnp.sum(x_ref[i].astype(jnp.float32), axis=1,
                         keepdims=True) * inv_hw                       # (C, 1)
        # fc1 (1x1 conv) + ReLU, fc2 + Sigmoid. Tiny column-form matmuls; they
        # stay off the DMA-bound critical path and need no relayout.
        s1 = jnp.maximum(
            jnp.dot(w1_ref[...], pooled,
                    preferred_element_type=jnp.float32) + b1_ref[...], 0.0)
        s2 = jax.nn.sigmoid(
            jnp.dot(w2_ref[...], s1,
                    preferred_element_type=jnp.float32) + b2_ref[...])  # (C, 1)
        # Re-read the tile for the scale (no casted duplicate kept live across
        # the matmuls); multiply in the input dtype, cast only on the store.
        o_ref[i] = (x_ref[i] * s2.astype(x_ref.dtype)).astype(o_ref.dtype)
        return carry

    jax.lax.fori_loop(0, nb, body, 0, unroll=bool(nb <= 8))


def _se_fused(x_flat, w1, b1c, w2, b2c, nb, vmem_limit):
    N, C, HW = x_flat.shape
    Csq = w1.shape[0]
    itemsize = x_flat.dtype.itemsize
    weight_bytes = sum(a.size * a.dtype.itemsize for a in (w1, b1c, w2, b2c))
    cost = pl.CostEstimate(
        flops=int(N * (2 * C * HW + 4 * C * Csq)),
        transcendentals=int(N * C),
        bytes_accessed=int(2 * N * C * HW * itemsize + weight_bytes),
    )
    return pl.pallas_call(
        _se_fused_kernel,
        out_shape=jax.ShapeDtypeStruct((N, C, HW), x_flat.dtype),
        grid_spec=pltpu.PrefetchScalarGridSpec(
            num_scalar_prefetch=0,
            grid=(N // nb,),
            in_specs=[
                pl.BlockSpec((nb, C, HW), lambda n: (n, 0, 0)),
                pl.BlockSpec((Csq, C), lambda n: (0, 0)),
                pl.BlockSpec((Csq, 1), lambda n: (0, 0)),
                pl.BlockSpec((C, Csq), lambda n: (0, 0)),
                pl.BlockSpec((C, 1), lambda n: (0, 0)),
            ],
            out_specs=pl.BlockSpec((nb, C, HW), lambda n: (n, 0, 0)),
        ),
        compiler_params=pltpu.CompilerParams(
            dimension_semantics=("parallel",),
            vmem_limit_bytes=int(vmem_limit)),
        cost_estimate=cost,
    )(x_flat, w1, b1c, w2, b2c)


# ---------------------------------------------------------------------------
# Two-pass fallback for large feature maps:
#   pass 1: tiled global-average-pool reduction over HW + excite -> s2 (N,C,1)
#   pass 2: streaming scale, grid tiled over (N, HW) -> out = s2 * x
# ---------------------------------------------------------------------------
def _se_two_pass(x_flat, w1, b1c, w2, b2c, t_hw, vmem_limit):
    N, C, HW = x_flat.shape
    Csq = w1.shape[0]
    n_hw = HW // t_hw
    inv_hw = 1.0 / HW
    itemsize = x_flat.dtype.itemsize

    def pool_excite_kernel(x_ref, w1_ref, b1_ref, w2_ref, b2_ref, s2_ref, acc_ref):
        h = pl.program_id(1)

        @pl.when(h == 0)
        def _():
            acc_ref[...] = jnp.zeros_like(acc_ref)

        acc_ref[...] += jnp.sum(x_ref[0].astype(jnp.float32), axis=1,
                                keepdims=True)                          # (C, 1)

        @pl.when(h == pl.num_programs(1) - 1)
        def _():
            pooled = acc_ref[...] * inv_hw
            s1 = jnp.maximum(
                jnp.dot(w1_ref[...], pooled,
                        preferred_element_type=jnp.float32) + b1_ref[...], 0.0)
            s2 = jax.nn.sigmoid(
                jnp.dot(w2_ref[...], s1,
                        preferred_element_type=jnp.float32) + b2_ref[...])
            s2_ref[0] = s2.astype(s2_ref.dtype)

    s2 = pl.pallas_call(
        pool_excite_kernel,
        out_shape=jax.ShapeDtypeStruct((N, C, 1), jnp.float32),
        grid_spec=pltpu.PrefetchScalarGridSpec(
            num_scalar_prefetch=0,
            grid=(N, n_hw),
            in_specs=[
                pl.BlockSpec((1, C, t_hw), lambda n, h: (n, 0, h)),
                pl.BlockSpec((Csq, C), lambda n, h: (0, 0)),
                pl.BlockSpec((Csq, 1), lambda n, h: (0, 0)),
                pl.BlockSpec((C, Csq), lambda n, h: (0, 0)),
                pl.BlockSpec((C, 1), lambda n, h: (0, 0)),
            ],
            out_specs=pl.BlockSpec((1, C, 1), lambda n, h: (n, 0, 0)),
            scratch_shapes=[pltpu.VMEM((C, 1), jnp.float32)],
        ),
        compiler_params=pltpu.CompilerParams(
            dimension_semantics=("parallel", "arbitrary"),
            vmem_limit_bytes=int(vmem_limit)),
        cost_estimate=pl.CostEstimate(
            flops=int(N * (C * HW + 4 * C * Csq)),
            transcendentals=int(N * C),
            bytes_accessed=int(N * C * HW * itemsize + N * C * 4)),
    )(x_flat, w1, b1c, w2, b2c)

    def scale_kernel(x_ref, s2_ref, o_ref):
        o_ref[...] = (x_ref[...] * s2_ref[...].astype(x_ref.dtype)).astype(o_ref.dtype)

    out = pl.pallas_call(
        scale_kernel,
        out_shape=jax.ShapeDtypeStruct((N, C, HW), x_flat.dtype),
        grid_spec=pltpu.PrefetchScalarGridSpec(
            num_scalar_prefetch=0,
            grid=(N, n_hw),
            in_specs=[
                pl.BlockSpec((1, C, t_hw), lambda n, h: (n, 0, h)),
                pl.BlockSpec((1, C, 1), lambda n, h: (n, 0, 0)),
            ],
            out_specs=pl.BlockSpec((1, C, t_hw), lambda n, h: (n, 0, h)),
        ),
        compiler_params=pltpu.CompilerParams(
            dimension_semantics=("parallel", "parallel"),
            vmem_limit_bytes=int(vmem_limit)),
        cost_estimate=pl.CostEstimate(
            flops=int(N * C * HW),
            transcendentals=0,
            bytes_accessed=int(2 * N * C * HW * itemsize + N * C * 4)),
    )(x_flat, s2)
    return out


# ---------------------------------------------------------------------------
# Wrapper: picks batching / path / VMEM budget.
# ---------------------------------------------------------------------------
def _largest_divisor_leq(n, cap):
    cap = max(1, min(n, int(cap)))
    for d in range(cap, 0, -1):
        if n % d == 0:
            return d
    return 1


def _pick_hw_tile(hw, c, itemsize, target_bytes):
    cands = [d for d in range(128, hw + 1, 128) if hw % d == 0]
    if not cands:
        return None
    fitting = [d for d in cands if 4 * c * d * itemsize <= target_bytes]
    return max(fitting) if fitting else min(cands)


def squeeze_excitation(x, w1, b1, w2, b2, *,
                       target_block_bytes=1 << 20,
                       vmem_budget_bytes=48 << 20,
                       force_two_pass=False):
    """x: (N, C, H, W); w1: (Csq, C); b1: (Csq,1) or (Csq,); w2: (C, Csq); b2: (C,1) or (C,)."""
    N, C, H, W = x.shape
    HW = H * W
    Csq = w1.shape[0]
    x_flat = x.reshape(N, C, HW)
    b1c = b1.reshape(Csq, 1)
    b2c = b2.reshape(C, 1)

    itemsize = x.dtype.itemsize
    per_sample_bytes = C * HW * itemsize
    weight_bytes = sum(a.size * a.dtype.itemsize for a in (w1, b1c, w2, b2c))

    # Batch samples per grid step so each block is ~target_block_bytes.
    nb = _largest_divisor_leq(N, max(1, target_block_bytes // max(per_sample_bytes, 1)))
    # double-buffered input + output blocks + weights + slack
    fused_vmem_needed = 4 * nb * per_sample_bytes + weight_bytes + (2 << 20)

    two_pass = force_two_pass or fused_vmem_needed > vmem_budget_bytes
    t_hw = _pick_hw_tile(HW, C, itemsize, target_block_bytes) if two_pass else None
    if two_pass and t_hw is None:
        # TODO(synk): HW not tileable by 128 and whole-sample block over budget;
        # needs a masked-edge pooling tile. Fall back to single pass.
        two_pass = False

    vmem_limit = int(min(max(fused_vmem_needed, 32 << 20), 48 << 20))
    if two_pass:
        out = _se_two_pass(x_flat, w1, b1c, w2, b2c, t_hw, vmem_limit)
    else:
        out = _se_fused(x_flat, w1, b1c, w2, b2c, nb, vmem_limit)
    return out.reshape(N, C, H, W)


def se_reference(x, w1, b1, w2, b2):
    pooled = jnp.mean(x, axis=(2, 3), keepdims=True)                     # (N,C,1,1)
    s1 = jnp.einsum("sc,ncij->nsij", w1, pooled) + b1.reshape(1, -1, 1, 1)
    s1 = jnp.maximum(s1, 0.0)
    s2 = jnp.einsum("cs,nsij->ncij", w2, s1) + b2.reshape(1, -1, 1, 1)
    s2 = jax.nn.sigmoid(s2)
    return s2 * x


if __name__ == "__main__":
    # Module config: input_c = expand_c = 8, squeeze_factor = 4 -> squeeze_c = 2
    N, C, H, W = 2, 8, 16, 16
    Csq = C // 4

    key = jax.random.PRNGKey(0)
    kx, k1, k2, k3, k4 = jax.random.split(key, 5)
    x = jax.random.normal(kx, (N, C, H, W), dtype=jnp.float32)
    # fc1: Conv2d(expand_c, squeeze_c, 1) -> weight (Csq, C), bias (Csq,)
    w1 = jax.random.normal(k1, (Csq, C), dtype=jnp.float32) * 0.1
    b1 = jax.random.normal(k2, (Csq, 1), dtype=jnp.float32) * 0.1
    # fc2: Conv2d(squeeze_c, expand_c, 1) -> weight (C, Csq), bias (C,)
    w2 = jax.random.normal(k3, (C, Csq), dtype=jnp.float32) * 0.1
    b2 = jax.random.normal(k4, (C, 1), dtype=jnp.float32) * 0.1

    ref = se_reference(x, w1, b1, w2, b2)

    # Fused single-pass path (batched samples per block).
    out = jax.block_until_ready(squeeze_excitation(x, w1, b1, w2, b2))
    assert out.shape == (N, C, H, W)
    assert jnp.allclose(out, ref, atol=1e-5, rtol=1e-5), "fused path mismatch"

    # Exercise the two-pass (tiled pool+excite, streaming scale) fallback that
    # large feature maps would take on v7x/v5e.
    out2 = jax.block_until_ready(
        squeeze_excitation(x, w1, b1, w2, b2,
                           force_two_pass=True, target_block_bytes=4096))
    assert jnp.allclose(out2, ref, atol=1e-5, rtol=1e-5), "two-pass path mismatch"

    print("KERNEL_OK")
</pallas_src>

<mosaic_0001>
module attributes {stable_mosaic.version = 11 : i64} {
  func.func @_se_fused_kernel(%arg0: i32, %arg1: memref<2x8x256xf32, #tpu.memory_space<vmem>>, %arg2: memref<2x8xf32, #tpu.memory_space<vmem>>, %arg3: memref<2x1xf32, #tpu.memory_space<vmem>>, %arg4: memref<8x2xf32, #tpu.memory_space<vmem>>, %arg5: memref<8x1xf32, #tpu.memory_space<vmem>>, %arg6: memref<2x8x256xf32, #tpu.memory_space<vmem>>) attributes {dimension_semantics = [#tpu.dimension_semantics<parallel>], iteration_bounds = array<i64: 1>, scalar_prefetch = 0 : i64, scratch_operands = 0 : i64, tpu.core_type = #tpu.core_type<tc>, window_params = [{transform_indices = @transform_0, window_bounds = array<i64: 2, 8, 256>}, {pipeline_mode = #tpu.pipeline_mode<synchronous>, transform_indices = @transform_1, window_bounds = array<i64: 2, 8>}, {pipeline_mode = #tpu.pipeline_mode<synchronous>, transform_indices = @transform_2, window_bounds = array<i64: 2, 1>}, {pipeline_mode = #tpu.pipeline_mode<synchronous>, transform_indices = @transform_3, window_bounds = array<i64: 8, 2>}, {pipeline_mode = #tpu.pipeline_mode<synchronous>, transform_indices = @transform_4, window_bounds = array<i64: 8, 1>}, {transform_indices = @transform_5, window_bounds = array<i64: 2, 8, 256>}]} {
    %c0_i32 = arith.constant 0 : i32
    %0 = arith.index_cast %c0_i32 : i32 to index
    %c0 = arith.constant 0 : index
    %c0_0 = arith.constant 0 : index
    %1 = vector.load %arg1[%0, %c0, %c0_0] : memref<2x8x256xf32, #tpu.memory_space<vmem>>, vector<1x8x256xf32>
    %2 = vector.shape_cast %1 : vector<1x8x256xf32> to vector<8x256xf32>
    %cst = arith.constant dense<0.000000e+00> : vector<8xf32>
    %3 = vector.multi_reduction <add>, %2, %cst [1] : vector<8x256xf32> to vector<8xf32>
    %4 = vector.shape_cast %3 : vector<8xf32> to vector<8x1xf32>
    %cst_1 = arith.constant 3.906250e-03 : f32
    %5 = vector.broadcast %cst_1 : f32 to vector<8x1xf32>
    %6 = arith.mulf %4, %5 : vector<8x1xf32>
    %c0_2 = arith.constant 0 : index
    %c0_3 = arith.constant 0 : index
    %7 = vector.load %arg2[%c0_2, %c0_3] : memref<2x8xf32, #tpu.memory_space<vmem>>, vector<2x8xf32>
    %cst_4 = arith.constant dense<0.000000e+00> : vector<2x1xf32>
    %8 = tpu.matmul %7, %6, %cst_4 {dimension_numbers = #tpu.dot_dimension_numbers<[1], [0], [0], [1], [0, 0, 1, 1], [], []>} : vector<2x8xf32>, vector<8x1xf32>, vector<2x1xf32> -> vector<2x1xf32>
    %c0_5 = arith.constant 0 : index
    %c0_6 = arith.constant 0 : index
    %9 = vector.load %arg3[%c0_5, %c0_6] : memref<2x1xf32, #tpu.memory_space<vmem>>, vector<2x1xf32>
    %10 = arith.addf %8, %9 : vector<2x1xf32>
    %cst_7 = arith.constant 0.000000e+00 : f32
    %11 = vector.broadcast %cst_7 : f32 to vector<2x1xf32>
    %12 = arith.maximumf %10, %11 : vector<2x1xf32>
    %c0_8 = arith.constant 0 : index
    %c0_9 = arith.constant 0 : index
    %13 = vector.load %arg4[%c0_8, %c0_9] : memref<8x2xf32, #tpu.memory_space<vmem>>, vector<8x2xf32>
    %cst_10 = arith.constant dense<0.000000e+00> : vector<8x1xf32>
    %14 = tpu.matmul %13, %12, %cst_10 {dimension_numbers = #tpu.dot_dimension_numbers<[1], [0], [0], [1], [0, 0, 1, 1], [], []>} : vector<8x2xf32>, vector<2x1xf32>, vector<8x1xf32> -> vector<8x1xf32>
    %c0_11 = arith.constant 0 : index
    %c0_12 = arith.constant 0 : index
    %15 = vector.load %arg5[%c0_11, %c0_12] : memref<8x1xf32, #tpu.memory_space<vmem>>, vector<8x1xf32>
    %16 = arith.addf %14, %15 : vector<8x1xf32>
    %17 = arith.negf %16 : vector<8x1xf32>
    %18 = math.exp %17 : vector<8x1xf32>
    %cst_13 = arith.constant 1.000000e+00 : f32
    %19 = vector.broadcast %cst_13 : f32 to vector<8x1xf32>
    %20 = arith.addf %19, %18 : vector<8x1xf32>
    %21 = arith.divf %19, %20 : vector<8x1xf32>
    %22 = arith.index_cast %c0_i32 : i32 to index
    %c0_14 = arith.constant 0 : index
    %c0_15 = arith.constant 0 : index
    %23 = vector.load %arg1[%22, %c0_14, %c0_15] : memref<2x8x256xf32, #tpu.memory_space<vmem>>, vector<1x8x256xf32>
    %24 = vector.shape_cast %23 : vector<1x8x256xf32> to vector<8x256xf32>
    %25 = vector.broadcast %21 : vector<8x1xf32> to vector<8x256xf32>
    %26 = arith.mulf %24, %25 : vector<8x256xf32>
    %27 = arith.index_cast %c0_i32 : i32 to index
    %c0_16 = arith.constant 0 : index
    %c0_17 = arith.constant 0 : index
    %28 = vector.load %arg6[%27, %c0_16, %c0_17] : memref<2x8x256xf32, #tpu.memory_space<vmem>>, vector<1x8x256xf32>
    %29 = vector.shape_cast %28 : vector<1x8x256xf32> to vector<8x256xf32>
    %30 = vector.shape_cast %26 : vector<8x256xf32> to vector<1x8x256xf32>
    tpu.vector_store %arg6[%27, %c0_16, %c0_17], %30 {strides = array<i32>} : memref<2x8x256xf32, #tpu.memory_space<vmem>>, vector<1x8x256xf32>,
    %c1_i32 = arith.constant 1 : i32
    %31 = arith.index_cast %c1_i32 : i32 to index
    %c0_18 = arith.constant 0 : index
    %c0_19 = arith.constant 0 : index
    %32 = vector.load %arg1[%31, %c0_18, %c0_19] : memref<2x8x256xf32, #tpu.memory_space<vmem>>, vector<1x8x256xf32>
    %33 = vector.shape_cast %32 : vector<1x8x256xf32> to vector<8x256xf32>
    %cst_20 = arith.constant dense<0.000000e+00> : vector<8xf32>
    %34 = vector.multi_reduction <add>, %33, %cst_20 [1] : vector<8x256xf32> to vector<8xf32>
    %35 = vector.shape_cast %34 : vector<8xf32> to vector<8x1xf32>
    %cst_21 = arith.constant 3.906250e-03 : f32
    %36 = vector.broadcast %cst_21 : f32 to vector<8x1xf32>
    %37 = arith.mulf %35, %36 : vector<8x1xf32>
    %c0_22 = arith.constant 0 : index
    %c0_23 = arith.constant 0 : index
    %38 = vector.load %arg2[%c0_22, %c0_23] : memref<2x8xf32, #tpu.memory_space<vmem>>, vector<2x8xf32>
    %cst_24 = arith.constant dense<0.000000e+00> : vector<2x1xf32>
    %39 = tpu.matmul %38, %37, %cst_24 {dimension_numbers = #tpu.dot_dimension_numbers<[1], [0], [0], [1], [0, 0, 1, 1], [], []>} : vector<2x8xf32>, vector<8x1xf32>, vector<2x1xf32> -> vector<2x1xf32>
    %c0_25 = arith.constant 0 : index
    %c0_26 = arith.constant 0 : index
    %40 = vector.load %arg3[%c0_25, %c0_26] : memref<2x1xf32, #tpu.memory_space<vmem>>, vector<2x1xf32>
    %41 = arith.addf %39, %40 : vector<2x1xf32>
    %cst_27 = arith.constant 0.000000e+00 : f32
    %42 = vector.broadcast %cst_27 : f32 to vector<2x1xf32>
    %43 = arith.maximumf %41, %42 : vector<2x1xf32>
    %c0_28 = arith.constant 0 : index
    %c0_29 = arith.constant 0 : index
    %44 = vector.load %arg4[%c0_28, %c0_29] : memref<8x2xf32, #tpu.memory_space<vmem>>, vector<8x2xf32>
    %cst_30 = arith.constant dense<0.000000e+00> : vector<8x1xf32>
    %45 = tpu.matmul %44, %43, %cst_30 {dimension_numbers = #tpu.dot_dimension_numbers<[1], [0], [0], [1], [0, 0, 1, 1], [], []>} : vector<8x2xf32>, vector<2x1xf32>, vector<8x1xf32> -> vector<8x1xf32>
    %c0_31 = arith.constant 0 : index
    %c0_32 = arith.constant 0 : index
    %46 = vector.load %arg5[%c0_31, %c0_32] : memref<8x1xf32, #tpu.memory_space<vmem>>, vector<8x1xf32>
    %47 = arith.addf %45, %46 : vector<8x1xf32>
    %48 = arith.negf %47 : vector<8x1xf32>
    %49 = math.exp %48 : vector<8x1xf32>
    %cst_33 = arith.constant 1.000000e+00 : f32
    %50 = vector.broadcast %cst_33 : f32 to vector<8x1xf32>
    %51 = arith.addf %50, %49 : vector<8x1xf32>
    %52 = arith.divf %50, %51 : vector<8x1xf32>
    %53 = arith.index_cast %c1_i32 : i32 to index
    %c0_34 = arith.constant 0 : index
    %c0_35 = arith.constant 0 : index
    %54 = vector.load %arg1[%53, %c0_34, %c0_35] : memref<2x8x256xf32, #tpu.memory_space<vmem>>, vector<1x8x256xf32>
    %55 = vector.shape_cast %54 : vector<1x8x256xf32> to vector<8x256xf32>
    %56 = vector.broadcast %52 : vector<8x1xf32> to vector<8x256xf32>
    %57 = arith.mulf %55, %56 : vector<8x256xf32>
    %58 = arith.index_cast %c1_i32 : i32 to index
    %c0_36 = arith.constant 0 : index
    %c0_37 = arith.constant 0 : index
    %59 = vector.load %arg6[%58, %c0_36, %c0_37] : memref<2x8x256xf32, #tpu.memory_space<vmem>>, vector<1x8x256xf32>
    %60 = vector.shape_cast %59 : vector<1x8x256xf32> to vector<8x256xf32>
    %61 = vector.shape_cast %57 : vector<8x256xf32> to vector<1x8x256xf32>
    tpu.vector_store %arg6[%58, %c0_36, %c0_37], %61 {strides = array<i32>} : memref<2x8x256xf32, #tpu.memory_space<vmem>>, vector<1x8x256xf32>,
    %c2_i32 = arith.constant 2 : i32
    return
  }
  func.func @transform_0(%arg0: i32) -> (i32, i32, i32) {
    %c0_i32 = arith.constant 0 : i32
    %c0_i32_0 = arith.constant 0 : i32
    %c0_i32_1 = arith.constant 0 : i32
    return %arg0, %c0_i32, %c0_i32_0 : i32, i32, i32
  }
  func.func @transform_1(%arg0: i32) -> (i32, i32) {
    %c0_i32 = arith.constant 0 : i32
    %c0_i32_0 = arith.constant 0 : i32
    %c0_i32_1 = arith.constant 0 : i32
    return %c0_i32, %c0_i32_0 : i32, i32
  }
  func.func @transform_2(%arg0: i32) -> (i32, i32) {
    %c0_i32 = arith.constant 0 : i32
    %c0_i32_0 = arith.constant 0 : i32
    %c0_i32_1 = arith.constant 0 : i32
    return %c0_i32, %c0_i32_0 : i32, i32
  }
  func.func @transform_3(%arg0: i32) -> (i32, i32) {
    %c0_i32 = arith.constant 0 : i32
    %c0_i32_0 = arith.constant 0 : i32
    %c0_i32_1 = arith.constant 0 : i32
    return %c0_i32, %c0_i32_0 : i32, i32
  }
  func.func @transform_4(%arg0: i32) -> (i32, i32) {
    %c0_i32 = arith.constant 0 : i32
    %c0_i32_0 = arith.constant 0 : i32
    %c0_i32_1 = arith.constant 0 : i32
    return %c0_i32, %c0_i32_0 : i32, i32
  }
  func.func @transform_5(%arg0: i32) -> (i32, i32, i32) {
    %c0_i32 = arith.constant 0 : i32
    %c0_i32_0 = arith.constant 0 : i32
    %c0_i32_1 = arith.constant 0 : i32
    return %arg0, %c0_i32, %c0_i32_0 : i32, i32, i32
  }
}

</mosaic_0001>

<llo_original>
// kernel: tpu_custom_call.1
$region0: #{tpu_custom_call.1}
  #allocation0 [shape = 'u32[]', space=smem, size = 0x4, offset = 0x4, fixed_abs, tag = 'smem constant byte address 0x4 - core index']
  #allocation1 [shape = 'u32[144,128]{1,0:T(1,128)}', space=vmem, size = 0x12000, scoped, tag = 'internal scratch']
  %s0 = inlined_call_operand.hbm [shape: f32[2,8,256], index: 0, kind: input, shape index: {}]
  %s1 = inlined_call_operand.vmem [shape: f32[2,8], index: 1, kind: input, shape index: {}]
  %s2 = inlined_call_operand.vmem [shape: f32[2,1], index: 2, kind: input, shape index: {}]
  %s3 = inlined_call_operand.vmem [shape: f32[8,2], index: 3, kind: input, shape index: {}]
  %s4 = inlined_call_operand.vmem [shape: f32[8,1], index: 4, kind: input, shape index: {}]
  %s5 = inlined_call_operand.hbm [shape: f32[2,8,256], index: 5, kind: output, shape index: {}]
  %s6 = sld [smem:[#allocation0]]
  $region34: #{tpu_custom_call.1} parent=0
    _
  %s8 = ssub.s32 1, %s6
  %s9 = scalar_select 0, %s8, %s6
  $region1: #{tpu_custom_call.1} parent=0
    #allocation2 [shape = 'u8[16384]{0}', space=vmem, size = 0x4000, scoped, tag = 'input window, operand 0, single buffered']
    #allocation3 [shape = 's32[1]{0}', space=sflag, size = 0x4, scoped, tag = 'scoped memory for tpu_custom_call.1']
    #allocation4 [shape = 's32[1]{0}', space=sflag, size = 0x4, scoped, tag = 'scoped memory for tpu_custom_call.1']
    #allocation5 [shape = 'u8[16384]{0}', space=vmem, size = 0x4000, scoped, tag = 'output window, operand 0, single buffered']
    %10 = vsyncpa [#allocation3], 0
    %11 = vsyncpa [#allocation4], 0
    // Predicated region
    $region2: #{tpu_custom_call.1} parent=1 // pred_check
      _
    $region3: #{tpu_custom_call.1} parent=1 // pred_check_branch
      %13 = sbr.rel (0) target = $region5
    $region4: #{tpu_custom_call.1} parent=1 // pred_region
      %s15 = ssub.s32 512, 512
      %16 = vsyncadd [#allocation3], %s15
      %s17 = sshll.u32 [#allocation2], 4
      %s18 = int_to_ptr.vmem [resolvable:$true] %s17
      %23 = dma.hbm_to_vmem [thread:$0]  %s0, 512, %s18, [#allocation3], 256, 256, 16
    $region5: #{tpu_custom_call.1} parent=1 // pred_fallthru
      _
    // Predicated region
    $region6: #{tpu_custom_call.1} parent=1 // pred_check
      _
    $region7: #{tpu_custom_call.1} parent=1 // pred_check_branch
      %25 = sbr.rel (0) target = $region9
    $region8: #{tpu_custom_call.1} parent=1 // pred_region
      _
    $region9: #{tpu_custom_call.1} parent=1 // pred_fallthru
      _
    // Predicated region
    $region10: #{tpu_custom_call.1} parent=1 // pred_check
      _
    $region11: #{tpu_custom_call.1} parent=1 // pred_check_branch
      %27 = sbr.rel (0) target = $region13
    $region12: #{tpu_custom_call.1} parent=1 // pred_region
      _
    $region13: #{tpu_custom_call.1} parent=1 // pred_fallthru
      _
    // Predicated region
    $region14: #{tpu_custom_call.1} parent=1 // pred_check
      _
    $region15: #{tpu_custom_call.1} parent=1 // pred_check_branch
      %29 = sbr.rel (0) target = $region17
    $region16: #{tpu_custom_call.1} parent=1 // pred_region
      _
    $region17: #{tpu_custom_call.1} parent=1 // pred_fallthru
      _
    // Predicated region
    $region18: #{tpu_custom_call.1} parent=1 // pred_check
      _
    $region19: #{tpu_custom_call.1} parent=1 // pred_check_branch
      %31 = sbr.rel (0) target = $region21
    $region20: #{tpu_custom_call.1} parent=1 // pred_region
      _
    $region21: #{tpu_custom_call.1} parent=1 // pred_fallthru
      _
    // Predicated region
    $region22: #{tpu_custom_call.1} parent=1 // pred_check
      _
    $region23: #{tpu_custom_call.1} parent=1 // pred_check_branch
      %33 = sbr.rel (0) target = $region25
    $region24: #{tpu_custom_call.1} parent=1 // pred_region
      %34 = dma.done [#allocation3], 512
    $region25: #{tpu_custom_call.1} parent=1 // pred_fallthru
      _
    %v35 = vld [vmem:[#allocation2] sm:$0xff]
    %v36 = vld [vmem:[#allocation2 + $0x8] sm:$0xff]
    %v37 = vadd.f32 %v35, %v36
    %38 = vadd.xlane.f32.xlu0 %v37
    %v39 = vpop.xlane.xlu0 %38
    %v40 = vmul.f32 %v39, 0.00390625
    %v41 = vld [vmem:[%s1] sm:$0x3]
    %v42 = vld [vmem:[%s2] sm:$0x3]
    %vm43 = vcmask 64512
    %v45 = vsel %vm43, %v41, 0
    %47 = vmatprep.subr.mxu0 0.0
    %48 = vmatpush1.msra.mxu0 0.0
    %49 = vmatprep.subr.mxu0 0.0
    %50 = vmatpush1.msra.mxu0 0.0
    %51 = vmatprep.subr.mxu0 0.0
    %52 = vmatpush1.msra.mxu0 0.0
    %53 = vmatprep.subr.mxu0 0.0
    %54 = vmatpush1.msra.mxu0 0.0
    %55 = vmatprep.subr.mxu0 0.0
    %56 = vmatpush1.msra.mxu0 0.0
    %57 = vmatprep.subr.mxu0 0.0
    %58 = vmatpush1.msra.mxu0 0.0
    %59 = vmatprep.subr.mxu0 0.0
    %60 = vmatpush1.msra.mxu0 0.0
    %61 = vmatprep.subr.mxu0 0.0
    %62 = vmatpush1.msra.mxu0 0.0
    %63 = vmatprep.subr.mxu0 0.0
    %64 = vmatpush1.msra.mxu0 0.0
    %65 = vmatprep.subr.mxu0 0.0
    %66 = vmatpush1.msra.mxu0 0.0
    %67 = vmatprep.subr.mxu0 0.0
    %68 = vmatpush1.msra.mxu0 0.0
    %69 = vmatprep.subr.mxu0 0.0
    %70 = vmatpush1.msra.mxu0 0.0
    %71 = vmatprep.subr.mxu0 0.0
    %72 = vmatpush1.msra.mxu0 0.0
    %73 = vmatprep.subr.mxu0 0.0
    %74 = vmatpush1.msra.mxu0 0.0
    %75 = vmatprep.subr.mxu0 0.0
    %76 = vmatpush1.msra.mxu0 0.0
    %77 = vmatprep.subr.mxu0 0.0
    %78 = vmatpush1.msra.mxu0 %v40
    %79 = vmatprep.subr.mxu0 0.0
    %80 = vmatpush2.msra.mxu0 0.0
    %81 = vmatprep.subr.mxu0 0.0
    %82 = vmatpush2.msra.mxu0 0.0
    %83 = vmatprep.subr.mxu0 0.0
    %84 = vmatpush2.msra.mxu0 0.0
    %85 = vmatprep.subr.mxu0 0.0
    %86 = vmatpush2.msra.mxu0 0.0
    %87 = vmatprep.subr.mxu0 0.0
    %88 = vmatpush2.msra.mxu0 0.0
    %89 = vmatprep.subr.mxu0 0.0
    %90 = vmatpush2.msra.mxu0 0.0
    %91 = vmatprep.subr.mxu0 0.0
    %92 = vmatpush2.msra.mxu0 0.0
    %93 = vmatprep.subr.mxu0 0.0
    %94 = vmatpush2.msra.mxu0 0.0
    %95 = vmatprep.subr.mxu0 0.0
    %96 = vmatpush2.msra.mxu0 0.0
    %97 = vmatprep.subr.mxu0 0.0
    %98 = vmatpush2.msra.mxu0 0.0
    %99 = vmatprep.subr.mxu0 0.0
    %100 = vmatpush2.msra.mxu0 0.0
    %101 = vmatprep.subr.mxu0 0.0
    %102 = vmatpush2.msra.mxu0 0.0
    %103 = vmatprep.subr.mxu0 0.0
    %104 = vmatpush2.msra.mxu0 0.0
    %105 = vmatprep.subr.mxu0 0.0
    %106 = vmatpush2.msra.mxu0 0.0
    %107 = vmatprep.subr.mxu0 0.0
    %108 = vmatpush2.msra.mxu0 0.0
    %109 = vmatprep.subr.mxu0 0.0
    %110 = vmatpush2.msra.mxu0 0.0
    %111 = vmatprep.mubr.f32.mxu0 0.0
    %112 = vmatmul.mubr.f32.gmra.mxu0 %v45
    %v113 = vpop.f32.mrf.mxu0
    %v114 = vadd.f32 %v42, %v113
    %v115 = vpop.f32.mrf.mxu0
    %116 = vdwg.mxu0
    %v117 = vmax.f32 %v114, 0.0
    %v118 = vld [vmem:[%s3] sm:$0xff]
    %v119 = vld [vmem:[%s4] sm:$0xff]
    %vm120 = vcmask 15360
    %v122 = vsel %vm120, %v118, 0
    %vm124 = vcmask 1041408
    %v126 = vsel %vm124, %v117, 0
    %128 = vmatprep.subr.mxu0 0.0
    %129 = vmatpush1.msra.mxu0 0.0
    %130 = vmatprep.subr.mxu0 0.0
    %131 = vmatpush1.msra.mxu0 0.0
    %132 = vmatprep.subr.mxu0 0.0
    %133 = vmatpush1.msra.mxu0 0.0
    %134 = vmatprep.subr.mxu0 0.0
    %135 = vmatpush1.msra.mxu0 0.0
    %136 = vmatprep.subr.mxu0 0.0
    %137 = vmatpush1.msra.mxu0 0.0
    %138 = vmatprep.subr.mxu0 0.0
    %139 = vmatpush1.msra.mxu0 0.0
    %140 = vmatprep.subr.mxu0 0.0
    %141 = vmatpush1.msra.mxu0 0.0
    %142 = vmatprep.subr.mxu0 0.0
    %143 = vmatpush1.msra.mxu0 0.0
    %144 = vmatprep.subr.mxu0 0.0
    %145 = vmatpush1.msra.mxu0 0.0
    %146 = vmatprep.subr.mxu0 0.0
    %147 = vmatpush1.msra.mxu0 0.0
    %148 = vmatprep.subr.mxu0 0.0
    %149 = vmatpush1.msra.mxu0 0.0
    %150 = vmatprep.subr.mxu0 0.0
    %151 = vmatpush1.msra.mxu0 0.0
    %152 = vmatprep.subr.mxu0 0.0
    %153 = vmatpush1.msra.mxu0 0.0
    %154 = vmatprep.subr.mxu0 0.0
    %155 = vmatpush1.msra.mxu0 0.0
    %156 = vmatprep.subr.mxu0 0.0
    %157 = vmatpush1.msra.mxu0 0.0
    %158 = vmatprep.subr.mxu0 0.0
    %159 = vmatpush1.msra.mxu0 %v126
    %160 = vmatprep.subr.mxu0 0.0
    %161 = vmatpush2.msra.mxu0 0.0
    %162 = vmatprep.subr.mxu0 0.0
    %163 = vmatpush2.msra.mxu0 0.0
    %164 = vmatprep.subr.mxu0 0.0
    %165 = vmatpush2.msra.mxu0 0.0
    %166 = vmatprep.subr.mxu0 0.0
    %167 = vmatpush2.msra.mxu0 0.0
    %168 = vmatprep.subr.mxu0 0.0
    %169 = vmatpush2.msra.mxu0 0.0
    %170 = vmatprep.subr.mxu0 0.0
    %171 = vmatpush2.msra.mxu0 0.0
    %172 = vmatprep.subr.mxu0 0.0
    %173 = vmatpush2.msra.mxu0 0.0
    %174 = vmatprep.subr.mxu0 0.0
    %175 = vmatpush2.msra.mxu0 0.0
    %176 = vmatprep.subr.mxu0 0.0
    %177 = vmatpush2.msra.mxu0 0.0
    %178 = vmatprep.subr.mxu0 0.0
    %179 = vmatpush2.msra.mxu0 0.0
    %180 = vmatprep.subr.mxu0 0.0
    %181 = vmatpush2.msra.mxu0 0.0
    %182 = vmatprep.subr.mxu0 0.0
    %183 = vmatpush2.msra.mxu0 0.0
    %184 = vmatprep.subr.mxu0 0.0
    %185 = vmatpush2.msra.mxu0 0.0
    %186 = vmatprep.subr.mxu0 0.0
    %187 = vmatpush2.msra.mxu0 0.0
    %188 = vmatprep.subr.mxu0 0.0
    %189 = vmatpush2.msra.mxu0 0.0
    %190 = vmatprep.subr.mxu0 0.0
    %191 = vmatpush2.msra.mxu0 0.0
    %192 = vmatprep.mubr.f32.mxu0 0.0
    %193 = vmatmul.mubr.f32.gmra.mxu0 %v122
    %v194 = vpop.f32.mrf.mxu0
    %v195 = vadd.f32 %v119, %v194
    %v196 = vpop.f32.mrf.mxu0
    %197 = vdwg.mxu0
    %v198 = vxor.u32 %v195, 2147483648
    %v199 = vmul.f32 %v198, 1.442695
    %v200 = vpow.pop %v199
    %v201 = vadd.f32 %v200, 1.0
    %v202 = vrcp.pop %v201
    %v203 = vmul.f32 1.0, %v202
    %205 = vset.pattern.permute.xlu0 0
    %206 = vperm.xlu0 %205, %v203
    %v207 = vpop.permute.xlu0 %206
    %v209 = vmul.f32 %v35, %v207
    %v210 = vmul.f32 %v36, %v207
    %211 = vst [vmem:[#allocation5] sm:$0xff] %v209
    %212 = vst [vmem:[#allocation5 + $0x8] sm:$0xff] %v210
    %s213 = scalar_lea.vmem [#allocation2], 16
    %v214 = vld [vmem:[%s213] sm:$0xff]
    %v215 = vld [vmem:[%s213 + $0x8] sm:$0xff]
    %v216 = vadd.f32 %v214, %v215
    %217 = vadd.xlane.f32.xlu0 %v216
    %v218 = vpop.xlane.xlu0 %217
    %v219 = vmul.f32 %v218, 0.00390625
    %v220 = vld [vmem:[%s1] sm:$0x3]
    %v221 = vld [vmem:[%s2] sm:$0x3]
    %v223 = vsel %vm43, %v220, 0
    %225 = vmatprep.subr.mxu0 0.0
    %226 = vmatpush1.msra.mxu0 0.0
    %227 = vmatprep.subr.mxu0 0.0
    %228 = vmatpush1.msra.mxu0 0.0
    %229 = vmatprep.subr.mxu0 0.0
    %230 = vmatpush1.msra.mxu0 0.0
    %231 = vmatprep.subr.mxu0 0.0
    %232 = vmatpush1.msra.mxu0 0.0
    %233 = vmatprep.subr.mxu0 0.0
    %234 = vmatpush1.msra.mxu0 0.0
    %235 = vmatprep.subr.mxu0 0.0
    %236 = vmatpush1.msra.mxu0 0.0
    %237 = vmatprep.subr.mxu0 0.0
    %238 = vmatpush1.msra.mxu0 0.0
    %239 = vmatprep.subr.mxu0 0.0
    %240 = vmatpush1.msra.mxu0 0.0
    %241 = vmatprep.subr.mxu0 0.0
    %242 = vmatpush1.msra.mxu0 0.0
    %243 = vmatprep.subr.mxu0 0.0
    %244 = vmatpush1.msra.mxu0 0.0
    %245 = vmatprep.subr.mxu0 0.0
    %246 = vmatpush1.msra.mxu0 0.0
    %247 = vmatprep.subr.mxu0 0.0
    %248 = vmatpush1.msra.mxu0 0.0
    %249 = vmatprep.subr.mxu0 0.0
    %250 = vmatpush1.msra.mxu0 0.0
    %251 = vmatprep.subr.mxu0 0.0
    %252 = vmatpush1.msra.mxu0 0.0
    %253 = vmatprep.subr.mxu0 0.0
    %254 = vmatpush1.msra.mxu0 0.0
    %255 = vmatprep.subr.mxu0 0.0
    %256 = vmatpush1.msra.mxu0 %v219
    %257 = vmatprep.subr.mxu0 0.0
    %258 = vmatpush2.msra.mxu0 0.0
    %259 = vmatprep.subr.mxu0 0.0
    %260 = vmatpush2.msra.mxu0 0.0
    %261 = vmatprep.subr.mxu0 0.0
    %262 = vmatpush2.msra.mxu0 0.0
    %263 = vmatprep.subr.mxu0 0.0
    %264 = vmatpush2.msra.mxu0 0.0
    %265 = vmatprep.subr.mxu0 0.0
    %266 = vmatpush2.msra.mxu0 0.0
    %267 = vmatprep.subr.mxu0 0.0
    %268 = vmatpush2.msra.mxu0 0.0
    %269 = vmatprep.subr.mxu0 0.0
    %270 = vmatpush2.msra.mxu0 0.0
    %271 = vmatprep.subr.mxu0 0.0
    %272 = vmatpush2.msra.mxu0 0.0
    %273 = vmatprep.subr.mxu0 0.0
    %274 = vmatpush2.msra.mxu0 0.0
    %275 = vmatprep.subr.mxu0 0.0
    %276 = vmatpush2.msra.mxu0 0.0
    %277 = vmatprep.subr.mxu0 0.0
    %278 = vmatpush2.msra.mxu0 0.0
    %279 = vmatprep.subr.mxu0 0.0
    %280 = vmatpush2.msra.mxu0 0.0
    %281 = vmatprep.subr.mxu0 0.0
    %282 = vmatpush2.msra.mxu0 0.0
    %283 = vmatprep.subr.mxu0 0.0
    %284 = vmatpush2.msra.mxu0 0.0
    %285 = vmatprep.subr.mxu0 0.0
    %286 = vmatpush2.msra.mxu0 0.0
    %287 = vmatprep.subr.mxu0 0.0
    %288 = vmatpush2.msra.mxu0 0.0
    %289 = vmatprep.mubr.f32.mxu0 0.0
    %290 = vmatmul.mubr.f32.gmra.mxu0 %v223
    %v291 = vpop.f32.mrf.mxu0
    %v292 = vadd.f32 %v221, %v291
    %v293 = vpop.f32.mrf.mxu0
    %294 = vdwg.mxu0
    %v295 = vmax.f32 %v292, 0.0
    %v296 = vld [vmem:[%s3] sm:$0xff]
    %v297 = vld [vmem:[%s4] sm:$0xff]
    %v299 = vsel %vm120, %v296, 0
    %v302 = vsel %vm124, %v295, 0
    %304 = vmatprep.subr.mxu0 0.0
    %305 = vmatpush1.msra.mxu0 0.0
    %306 = vmatprep.subr.mxu0 0.0
    %307 = vmatpush1.msra.mxu0 0.0
    %308 = vmatprep.subr.mxu0 0.0
    %309 = vmatpush1.msra.mxu0 0.0
    %310 = vmatprep.subr.mxu0 0.0
    %311 = vmatpush1.msra.mxu0 0.0
    %312 = vmatprep.subr.mxu0 0.0
    %313 = vmatpush1.msra.mxu0 0.0
    %314 = vmatprep.subr.mxu0 0.0
    %315 = vmatpush1.msra.mxu0 0.0
    %316 = vmatprep.subr.mxu0 0.0
    %317 = vmatpush1.msra.mxu0 0.0
    %318 = vmatprep.subr.mxu0 0.0
    %319 = vmatpush1.msra.mxu0 0.0
    %320 = vmatprep.subr.mxu0 0.0
    %321 = vmatpush1.msra.mxu0 0.0
    %322 = vmatprep.subr.mxu0 0.0
    %323 = vmatpush1.msra.mxu0 0.0
    %324 = vmatprep.subr.mxu0 0.0
    %325 = vmatpush1.msra.mxu0 0.0
    %326 = vmatprep.subr.mxu0 0.0
    %327 = vmatpush1.msra.mxu0 0.0
    %328 = vmatprep.subr.mxu0 0.0
    %329 = vmatpush1.msra.mxu0 0.0
    %330 = vmatprep.subr.mxu0 0.0
    %331 = vmatpush1.msra.mxu0 0.0
    %332 = vmatprep.subr.mxu0 0.0
    %333 = vmatpush1.msra.mxu0 0.0
    %334 = vmatprep.subr.mxu0 0.0
    %335 = vmatpush1.msra.mxu0 %v302
    %336 = vmatprep.subr.mxu0 0.0
    %337 = vmatpush2.msra.mxu0 0.0
    %338 = vmatprep.subr.mxu0 0.0
    %339 = vmatpush2.msra.mxu0 0.0
    %340 = vmatprep.subr.mxu0 0.0
    %341 = vmatpush2.msra.mxu0 0.0
    %342 = vmatprep.subr.mxu0 0.0
    %343 = vmatpush2.msra.mxu0 0.0
    %344 = vmatprep.subr.mxu0 0.0
    %345 = vmatpush2.msra.mxu0 0.0
    %346 = vmatprep.subr.mxu0 0.0
    %347 = vmatpush2.msra.mxu0 0.0
    %348 = vmatprep.subr.mxu0 0.0
    %349 = vmatpush2.msra.mxu0 0.0
    %350 = vmatprep.subr.mxu0 0.0
    %351 = vmatpush2.msra.mxu0 0.0
    %352 = vmatprep.subr.mxu0 0.0
    %353 = vmatpush2.msra.mxu0 0.0
    %354 = vmatprep.subr.mxu0 0.0
    %355 = vmatpush2.msra.mxu0 0.0
    %356 = vmatprep.subr.mxu0 0.0
    %357 = vmatpush2.msra.mxu0 0.0
    %358 = vmatprep.subr.mxu0 0.0
    %359 = vmatpush2.msra.mxu0 0.0
    %360 = vmatprep.subr.mxu0 0.0
    %361 = vmatpush2.msra.mxu0 0.0
    %362 = vmatprep.subr.mxu0 0.0
    %363 = vmatpush2.msra.mxu0 0.0
    %364 = vmatprep.subr.mxu0 0.0
    %365 = vmatpush2.msra.mxu0 0.0
    %366 = vmatprep.subr.mxu0 0.0
    %367 = vmatpush2.msra.mxu0 0.0
    %368 = vmatprep.mubr.f32.mxu0 0.0
    %369 = vmatmul.mubr.f32.gmra.mxu0 %v299
    %v370 = vpop.f32.mrf.mxu0
    %v371 = vadd.f32 %v297, %v370
    %v372 = vpop.f32.mrf.mxu0
    %373 = vdwg.mxu0
    %v374 = vxor.u32 %v371, 2147483648
    %v375 = vmul.f32 %v374, 1.442695
    %v376 = vpow.pop %v375
    %v377 = vadd.f32 %v376, 1.0
    %v378 = vrcp.pop %v377
    %v379 = vmul.f32 1.0, %v378
    %381 = vset.pattern.permute.xlu0 0
    %382 = vperm.xlu0 %381, %v379
    %v383 = vpop.permute.xlu0 %382
    %v385 = vmul.f32 %v214, %v383
    %v386 = vmul.f32 %v215, %v383
    %s387 = scalar_lea.vmem [#allocation5], 16
    %388 = vst [vmem:[%s387] sm:$0xff] %v385
    %389 = vst [vmem:[%s387 + $0x8] sm:$0xff] %v386
    // Predicated region
    $region26: #{tpu_custom_call.1} parent=1 // pred_check
      _
    $region27: #{tpu_custom_call.1} parent=1 // pred_check_branch
      %391 = sbr.rel (0) target = $region29
    $region28: #{tpu_custom_call.1} parent=1 // pred_region
      %s393 = ssub.s32 512, 512
      %394 = vsyncadd [#allocation4], %s393
      %s395 = sshll.u32 [#allocation5], 4
      %s396 = int_to_ptr.vmem [resolvable:$true] %s395
      %401 = dma.vmem_to_hbm [thread:$0]  %s396, 512, %s5, [#allocation4], 256, 256, 16
    $region29: #{tpu_custom_call.1} parent=1 // pred_fallthru
      _
    // Predicated region
    $region30: #{tpu_custom_call.1} parent=1 // pred_check
      _
    $region31: #{tpu_custom_call.1} parent=1 // pred_check_branch
      %403 = sbr.rel (0) target = $region33
    $region32: #{tpu_custom_call.1} parent=1 // pred_region
      %404 = dma.done [#allocation4], 512
    $region33: #{tpu_custom_call.1} parent=1 // pred_fallthru
      _
    %405 = vsyncpa [#allocation3], 1
    %406 = vsyncpa [#allocation4], 1

</llo_original>
